<compile_context>
chip_gen: v7x
topology: tpu7x:2x2x1
jax: 0.10.0
libtpu: 0.0.40
codegen_flags: <defaults>
</compile_context>

<pallas_src>
import functools

import numpy as np
import jax
import jax.numpy as jnp
from jax.experimental import pallas as pl
from jax.experimental.pallas import tpu as pltpu


# -----------------------------------------------------------------------------
# Pallas kernels
# -----------------------------------------------------------------------------
def conv_mm_kernel(p_ref, w_ref, b_ref, o_ref):
    """p_ref: (1, H*W, 9*Cin) im2col patches for one batch element (f32)
       w_ref: (9*Cin, Cout) bf16, b_ref: (1, Cout) f32, o_ref: (1, H*W, Cout)."""
    p = p_ref[0].astype(jnp.bfloat16)                       # (HW, 9*Cin)
    acc = jnp.dot(p, w_ref[...], preferred_element_type=jnp.float32)
    out = jnp.maximum(acc + b_ref[...], 0.0)                # bias + ReLU
    o_ref[0] = out.astype(o_ref.dtype)


def conv3x3_relu(x, w_mat, b):
    """x: (N, H, W, Cin) NHWC f32; w_mat: (9*Cin, Cout) bf16; b: (Cout,) f32.
    'same' padding, stride 1, fused ReLU."""
    N, H, W, Cin = x.shape
    Cout = w_mat.shape[-1]
    K = 9 * Cin
    xp = jnp.pad(x, ((0, 0), (1, 1), (1, 1), (0, 0)))
    # im2col: 9 shifted windows concatenated along channels -> (N, H*W, 9*Cin)
    cols = [xp[:, dy:dy + H, dx:dx + W, :] for dy in range(3) for dx in range(3)]
    patches = jnp.concatenate(cols, axis=-1).reshape(N, H * W, K)

    out = pl.pallas_call(
        conv_mm_kernel,
        out_shape=jax.ShapeDtypeStruct((N, H * W, Cout), x.dtype),
        grid_spec=pltpu.PrefetchScalarGridSpec(
            num_scalar_prefetch=0,
            grid=(N,),
            in_specs=[
                pl.BlockSpec((1, H * W, K), lambda n: (n, 0, 0)),
                pl.BlockSpec((K, Cout), lambda n: (0, 0)),
                pl.BlockSpec((1, Cout), lambda n: (0, 0)),
            ],
            out_specs=pl.BlockSpec((1, H * W, Cout), lambda n: (n, 0, 0)),
        ),
        compiler_params=pltpu.CompilerParams(
            dimension_semantics=("parallel",),
            vmem_limit_bytes=32 * 1024 * 1024),
    )(patches, w_mat, b.reshape(1, -1))
    return out.reshape(N, H, W, Cout)


def linear_kernel(x_ref, w_ref, b_ref, o_ref, acc_ref, *, apply_relu):
    """K-tiled matmul: x (M, tk) f32 @ w (tk, tn) bf16, f32 accumulation over
    the K grid axis in a VMEM scratch; bias + optional ReLU in the epilogue."""
    k = pl.program_id(1)

    @pl.when(k == 0)
    def _():
        acc_ref[...] = jnp.zeros_like(acc_ref)

    acc_ref[...] += jnp.dot(x_ref[...].astype(jnp.bfloat16), w_ref[...],
                            preferred_element_type=jnp.float32)

    @pl.when(k == pl.num_programs(1) - 1)
    def _():
        r = acc_ref[...] + b_ref[...]
        if apply_relu:
            r = jnp.maximum(r, 0.0)
        o_ref[...] = r.astype(o_ref.dtype)


def _pick_tile(dim, candidates):
    for c in candidates:
        if dim % c == 0:
            return c
    # Clamp: never let an unaligned dim silently become a huge tile.
    assert dim <= 1024, f"no aligned tile found for dim={dim}"
    return dim


def linear(x, w, b, *, relu):
    """x: (M, K) f32; w: (K, N) bf16 (already transposed vs. PyTorch (N, K));
    b: (N,) f32."""
    M, K = x.shape
    N = w.shape[1]
    # ~3.5-4 MiB bf16 weight tiles: big enough to amortize per-step overhead,
    # small enough (double-buffered) for v7x's 64 MiB VMEM.
    tk = _pick_tile(K, (2048, 1792, 1024, 512, 256, 128))
    tn = _pick_tile(N, (1024, 512, 256, 128))
    grid = (N // tn, K // tk)
    kernel = functools.partial(linear_kernel, apply_relu=relu)
    return pl.pallas_call(
        kernel,
        out_shape=jax.ShapeDtypeStruct((M, N), x.dtype),
        grid_spec=pltpu.PrefetchScalarGridSpec(
            num_scalar_prefetch=0,
            grid=grid,
            in_specs=[
                pl.BlockSpec((M, tk), lambda j, k: (0, k)),
                pl.BlockSpec((tk, tn), lambda j, k: (k, j)),
                pl.BlockSpec((1, tn), lambda j, k: (0, j)),
            ],
            out_specs=pl.BlockSpec((M, tn), lambda j, k: (0, j)),
            scratch_shapes=[pltpu.VMEM((M, tn), jnp.float32)],
        ),
        compiler_params=pltpu.CompilerParams(
            dimension_semantics=("parallel", "arbitrary"),
            vmem_limit_bytes=32 * 1024 * 1024),
    )(x, w, b.reshape(1, -1))


# -----------------------------------------------------------------------------
# Plain-JAX glue (negligible FLOPs)
# -----------------------------------------------------------------------------
def maxpool2x2(x):  # NHWC, kernel=2, stride=2 (matches nn.MaxPool2d(2, 2))
    N, H, W, C = x.shape
    return x.reshape(N, H // 2, 2, W // 2, 2, C).max(axis=(2, 4))


def _adaptive_pool_matrix(in_size, out_size):
    # Exact AdaptiveAvgPool2d window semantics: [floor(i*L/out), ceil((i+1)*L/out))
    A = np.zeros((out_size, in_size), dtype=np.float32)
    for i in range(out_size):
        s = (i * in_size) // out_size
        e = -(-((i + 1) * in_size) // out_size)
        A[i, s:e] = 1.0 / (e - s)
    return jnp.asarray(A)


def adaptive_avg_pool(x, out_h, out_w):  # NHWC
    _, H, W, _ = x.shape
    Ah = _adaptive_pool_matrix(H, out_h)    # (out_h, H)
    Aw = _adaptive_pool_matrix(W, out_w)    # (out_w, W)
    x = jnp.einsum('ih,nhwc->niwc', Ah, x)
    x = jnp.einsum('jw,niwc->nijc', Aw, x)
    return x                                # (N, out_h, out_w, C)


# -----------------------------------------------------------------------------
# Parameter init (deterministic, matching VGG._initialize_weights)
# -----------------------------------------------------------------------------
# Small VGG-style feature config; last conv must produce 512 channels to match
# the hard-coded 512*7*7 classifier input of the reference module.
CFG = [16, "M", 32, "M", 512, "M"]


def init_params(key, num_classes):
    feats = []
    cin = 3
    for v in CFG:
        if v == "M":
            feats.append(("pool", None, None))
        else:
            key, k1 = jax.random.split(key)
            fan_out = v * 3 * 3                     # kaiming_normal_, fan_out, relu
            std = (2.0 / fan_out) ** 0.5
            w = std * jax.random.normal(k1, (3, 3, cin, v), jnp.float32)
            # Pre-flatten (dy, dx, cin) -> K axis; store bf16 for HBM bandwidth.
            w = w.reshape(9 * cin, v).astype(jnp.bfloat16)
            b = jnp.zeros((v,), jnp.float32)
            feats.append(("conv", w, b))
            cin = v
    cls = []
    for din, dout in [(512 * 7 * 7, 4096), (4096, 4096), (4096, num_classes)]:
        key, k1 = jax.random.split(key)
        w = (0.01 * jax.random.normal(k1, (din, dout), jnp.float32))  # N(0, 0.01)
        cls.append((w.astype(jnp.bfloat16), jnp.zeros((dout,), jnp.float32)))
    return {"features": feats, "classifier": cls}


# -----------------------------------------------------------------------------
# VGG forward
# -----------------------------------------------------------------------------
def vgg_forward(params, x_nchw):
    x = jnp.transpose(x_nchw, (0, 2, 3, 1))        # NCHW -> NHWC for the kernels
    for kind, w, b in params["features"]:
        if kind == "pool":
            x = maxpool2x2(x)
        else:
            x = conv3x3_relu(x, w, b)
    x = adaptive_avg_pool(x, 7, 7)                 # (N, 7, 7, 512)
    x = jnp.transpose(x, (0, 3, 1, 2))             # back to NCHW for flatten order
    x = x.reshape(x.shape[0], -1)                  # x.view(N, -1) -> (N, 512*7*7)

    (w1, b1), (w2, b2), (w3, b3) = params["classifier"]
    x = linear(x, w1, b1, relu=True)
    # nn.Dropout(): identity in inference mode
    x = linear(x, w2, b2, relu=True)
    # nn.Dropout(): identity in inference mode
    x = linear(x, w3, b3, relu=False)
    return x


if __name__ == "__main__":
    num_classes = 10
    key = jax.random.PRNGKey(0)
    pkey, xkey = jax.random.split(key)
    params = init_params(pkey, num_classes)
    x = jax.random.normal(xkey, (2, 3, 32, 32), jnp.float32)   # small NCHW input
    out = vgg_forward(params, x)
    out = jax.block_until_ready(out)
    assert out.shape == (2, num_classes)
    assert jnp.all(jnp.isfinite(out))
    print("KERNEL_OK")
</pallas_src>

<mosaic_0001>
module attributes {stable_mosaic.version = 11 : i64} {
  func.func @conv_mm_kernel(%arg0: i32, %arg1: memref<1x1024x27xf32, #tpu.memory_space<vmem>>, %arg2: memref<27x16xbf16, #tpu.memory_space<vmem>>, %arg3: memref<1x16xf32, #tpu.memory_space<vmem>>, %arg4: memref<1x1024x16xf32, #tpu.memory_space<vmem>>) attributes {dimension_semantics = [#tpu.dimension_semantics<parallel>], iteration_bounds = array<i64: 2>, scalar_prefetch = 0 : i64, scratch_operands = 0 : i64, tpu.core_type = #tpu.core_type<tc>, window_params = [{transform_indices = @transform_0, window_bounds = array<i64: 1, 1024, 27>}, {pipeline_mode = #tpu.pipeline_mode<synchronous>, transform_indices = @transform_1, window_bounds = array<i64: 27, 16>}, {pipeline_mode = #tpu.pipeline_mode<synchronous>, transform_indices = @transform_2, window_bounds = array<i64: 1, 16>}, {transform_indices = @transform_3, window_bounds = array<i64: 1, 1024, 16>}]} {
    %c0 = arith.constant 0 : index
    %c0_0 = arith.constant 0 : index
    %c0_1 = arith.constant 0 : index
    %0 = vector.load %arg1[%c0, %c0_0, %c0_1] : memref<1x1024x27xf32, #tpu.memory_space<vmem>>, vector<1x1024x27xf32>
    %1 = vector.shape_cast %0 : vector<1x1024x27xf32> to vector<1024x27xf32>
    %2 = arith.truncf %1 : vector<1024x27xf32> to vector<1024x27xbf16>
    %c0_2 = arith.constant 0 : index
    %c0_3 = arith.constant 0 : index
    %3 = vector.load %arg2[%c0_2, %c0_3] : memref<27x16xbf16, #tpu.memory_space<vmem>>, vector<27x16xbf16>
    %cst = arith.constant dense<0.000000e+00> : vector<1024x16xf32>
    %4 = tpu.matmul %2, %3, %cst {dimension_numbers = #tpu.dot_dimension_numbers<[1], [0], [0], [1], [0, 0, 1, 1], [], []>} : vector<1024x27xbf16>, vector<27x16xbf16>, vector<1024x16xf32> -> vector<1024x16xf32>
    %c0_4 = arith.constant 0 : index
    %c0_5 = arith.constant 0 : index
    %5 = vector.load %arg3[%c0_4, %c0_5] : memref<1x16xf32, #tpu.memory_space<vmem>>, vector<1x16xf32>
    %6 = vector.broadcast %5 : vector<1x16xf32> to vector<1024x16xf32>
    %7 = arith.addf %4, %6 : vector<1024x16xf32>
    %cst_6 = arith.constant 0.000000e+00 : f32
    %8 = vector.broadcast %cst_6 : f32 to vector<1024x16xf32>
    %9 = arith.maximumf %7, %8 : vector<1024x16xf32>
    %c0_7 = arith.constant 0 : index
    %c0_8 = arith.constant 0 : index
    %c0_9 = arith.constant 0 : index
    %10 = vector.load %arg4[%c0_7, %c0_8, %c0_9] : memref<1x1024x16xf32, #tpu.memory_space<vmem>>, vector<1x1024x16xf32>
    %11 = vector.shape_cast %10 : vector<1x1024x16xf32> to vector<1024x16xf32>
    %12 = vector.shape_cast %9 : vector<1024x16xf32> to vector<1x1024x16xf32>
    tpu.vector_store %arg4[%c0_7, %c0_8, %c0_9], %12 {strides = array<i32>} : memref<1x1024x16xf32, #tpu.memory_space<vmem>>, vector<1x1024x16xf32>,
    return
  }
  func.func @transform_0(%arg0: i32) -> (i32, i32, i32) {
    %c0_i32 = arith.constant 0 : i32
    %c0_i32_0 = arith.constant 0 : i32
    %c0_i32_1 = arith.constant 0 : i32
    return %arg0, %c0_i32, %c0_i32_0 : i32, i32, i32
  }
  func.func @transform_1(%arg0: i32) -> (i32, i32) {
    %c0_i32 = arith.constant 0 : i32
    %c0_i32_0 = arith.constant 0 : i32
    %c0_i32_1 = arith.constant 0 : i32
    return %c0_i32, %c0_i32_0 : i32, i32
  }
  func.func @transform_2(%arg0: i32) -> (i32, i32) {
    %c0_i32 = arith.constant 0 : i32
    %c0_i32_0 = arith.constant 0 : i32
    %c0_i32_1 = arith.constant 0 : i32
    return %c0_i32, %c0_i32_0 : i32, i32
  }
  func.func @transform_3(%arg0: i32) -> (i32, i32, i32) {
    %c0_i32 = arith.constant 0 : i32
    %c0_i32_0 = arith.constant 0 : i32
    %c0_i32_1 = arith.constant 0 : i32
    return %arg0, %c0_i32, %c0_i32_0 : i32, i32, i32
  }
}

</mosaic_0001>

<llo_original>
// kernel: tpu_custom_call.1
$region0: #{tpu_custom_call.1}
  #allocation0 [shape = 'u32[]', space=smem, size = 0x4, offset = 0x4, fixed_abs, tag = 'smem constant byte address 0x4 - core index']
  #allocation1 [shape = 'u32[144,128]{1,0:T(1,128)}', space=vmem, size = 0x12000, scoped, tag = 'internal scratch']
  %s0 = inlined_call_operand.vmem [shape: f32[2,1024,27], index: 0, kind: input, shape index: {}]
  %s1 = inlined_call_operand.vmem [shape: bf16[27,16], index: 1, kind: input, shape index: {}]
  %s2 = inlined_call_operand.vmem [shape: f32[1,16], index: 2, kind: input, shape index: {}]
  %s3 = inlined_call_operand.vmem [shape: f32[2,1024,16], index: 3, kind: output, shape index: {}]
  %s4 = sld [smem:[#allocation0]]
  $region45: #{tpu_custom_call.1} parent=0
    _
  %s6 = ssub.s32 1, %s4
  %s7 = scalar_select 0, %s6, %s4
  loop: start=0, step=1, limit=4
  $region2: #{tpu_custom_call.1} parent=0 // loop_pre_header
    _
  $region3: #{tpu_custom_call.1} parent=0 // loop_header
    %s9 = sphi 0, %s13
    %p10 = scmp.ge.s32.totalorder %s9, 4
    %s19 = sphi 0, %s21
    %s22 = sphi 0, %s19
    %s23 = sphi 0, %s22
    %s39 = sphi 0, %s23
    %s43 = sphi 0, %s43
    %s45 = sphi 0, %s43
    %s46 = sphi 0, %s45
    %s60 = sphi 0, %s46
    %s64 = sphi 0, %s64
    %s66 = sphi 0, %s64
    %s67 = sphi 0, %s66
    %s81 = sphi 0, %s67
    %s87 = sphi 0, %s89
    %s90 = sphi 0, %s87
    %s91 = sphi 0, %s90
    %s107 = sphi 0, %s91
  $region4: #{tpu_custom_call.1} parent=0 // loop_header_branch
    %12 = sbr.rel (%p10) target = $region8
  $region5: #{tpu_custom_call.1} parent=0 // loop_body
    %s14 = ssub.s32 %s9, 1
    %s15 = ssub.s32 %s9, 2
    %s16 = sadd.s32 %s9, 1
    %s17 = ssub.s32 %s9, %s16
    %p18 = scmp.eq.s32.totalorder %s17, 0
    %s20 = sadd.s32 %s19, 1
    %s21 = scalar_select %p18, %s19, %s20
    %p24 = pneg %p18
    %p25 = scmp.eq.s32.totalorder %s9, 1
    %p26 = por %p24, %p25
    %p27 = scmp.ne.s32.totalorder %s19, %s22
    %p28 = scmp.eq.s32.totalorder %s9, 0
    %p29 = por %p27, %p28
    %p30 = scmp.ne.s32.totalorder %s19, %s22
    %p31 = scmp.eq.s32.totalorder %s14, 1
    %p32 = por %p30, %p31
    %p33 = scmp.ne.s32.totalorder %s22, %s23
    %p34 = scmp.eq.s32.totalorder %s14, 0
    %p35 = por %p33, %p34
    %p36 = scmp.ne.s32.totalorder %s22, %s23
    %p37 = scmp.eq.s32.totalorder %s15, 1
    %p38 = por %p36, %p37
    %p40 = scmp.ne.s32.totalorder %s23, %s39
    %p41 = scmp.eq.s32.totalorder %s15, 0
    %p42 = por %p40, %p41
    %s44 = sadd.s32 %s43, 1
    %p47 = scmp.eq.s32.totalorder %s9, 1
    %p48 = scmp.ne.s32.totalorder %s43, %s45
    %p49 = scmp.eq.s32.totalorder %s9, 0
    %p50 = por %p48, %p49
    %p51 = scmp.ne.s32.totalorder %s43, %s45
    %p52 = scmp.eq.s32.totalorder %s14, 1
    %p53 = por %p51, %p52
    %p54 = scmp.ne.s32.totalorder %s45, %s46
    %p55 = scmp.eq.s32.totalorder %s14, 0
    %p56 = por %p54, %p55
    %p57 = scmp.ne.s32.totalorder %s45, %s46
    %p58 = scmp.eq.s32.totalorder %s15, 1
    %p59 = por %p57, %p58
    %p61 = scmp.ne.s32.totalorder %s46, %s60
    %p62 = scmp.eq.s32.totalorder %s15, 0
    %p63 = por %p61, %p62
    %s65 = sadd.s32 %s64, 1
    %p68 = scmp.eq.s32.totalorder %s9, 1
    %p69 = scmp.ne.s32.totalorder %s64, %s66
    %p70 = scmp.eq.s32.totalorder %s9, 0
    %p71 = por %p69, %p70
    %p72 = scmp.ne.s32.totalorder %s64, %s66
    %p73 = scmp.eq.s32.totalorder %s14, 1
    %p74 = por %p72, %p73
    %p75 = scmp.ne.s32.totalorder %s66, %s67
    %p76 = scmp.eq.s32.totalorder %s14, 0
    %p77 = por %p75, %p76
    %p78 = scmp.ne.s32.totalorder %s66, %s67
    %p79 = scmp.eq.s32.totalorder %s15, 1
    %p80 = por %p78, %p79
    %p82 = scmp.ne.s32.totalorder %s67, %s81
    %p83 = scmp.eq.s32.totalorder %s15, 0
    %p84 = por %p82, %p83
    %s85 = ssub.s32 %s9, %s16
    %p86 = scmp.eq.s32.totalorder %s85, 0
    %s88 = sadd.s32 %s87, 1
    %s89 = scalar_select %p86, %s87, %s88
    %p92 = pneg %p86
    %p93 = scmp.eq.s32.totalorder %s9, 1
    %p94 = por %p92, %p93
    %p95 = scmp.ne.s32.totalorder %s87, %s90
    %p96 = scmp.eq.s32.totalorder %s9, 0
    %p97 = por %p95, %p96
    %p98 = scmp.ne.s32.totalorder %s87, %s90
    %p99 = scmp.eq.s32.totalorder %s14, 1
    %p100 = por %p98, %p99
    %p101 = scmp.ne.s32.totalorder %s90, %s91
    %p102 = scmp.eq.s32.totalorder %s14, 0
    %p103 = por %p101, %p102
    %p104 = scmp.ne.s32.totalorder %s90, %s91
    %p105 = scmp.eq.s32.totalorder %s15, 1
    %p106 = por %p104, %p105
    %p108 = scmp.ne.s32.totalorder %s91, %s107
    %p109 = scmp.eq.s32.totalorder %s15, 0
    %p110 = por %p108, %p109
    %p111 = scmp.le.s32.totalorder 1, %s9
    %p112 = scmp.lt.s32.totalorder %s9, 3
    %p113 = pnand %p111, %p112
    %p114 = pneg %p113
    // Predicated region
    $region9: #{tpu_custom_call.1} parent=5 // pred_check
      _
    $region10: #{tpu_custom_call.1} parent=5 // pred_check_branch
      %116 = sbr.rel (%p113) target = $region12
    $region11: #{tpu_custom_call.1} parent=5 // pred_region
      %s117 = ssub.s32 %s9, 1
      // Predicated region
      $region13: #{tpu_custom_call.1} parent=11 // pred_check
        %p118 = pneg %p56
      $region14: #{tpu_custom_call.1} parent=11 // pred_check_branch
        %120 = sbr.rel (%p118) target = $region16
      $region15: #{tpu_custom_call.1} parent=11 // pred_region
        _
      $region16: #{tpu_custom_call.1} parent=11 // pred_fallthru
        _
      // Predicated region
      $region17: #{tpu_custom_call.1} parent=11 // pred_check
        %p121 = pneg %p77
      $region18: #{tpu_custom_call.1} parent=11 // pred_check_branch
        %123 = sbr.rel (%p121) target = $region20
      $region19: #{tpu_custom_call.1} parent=11 // pred_region
        _
      $region20: #{tpu_custom_call.1} parent=11 // pred_fallthru
        _
    $region12: #{tpu_custom_call.1} parent=5 // pred_fallthru
      _
    %p124 = scmp.lt.s32.totalorder %s9, 2
    // Predicated region
    $region21: #{tpu_custom_call.1} parent=5 // pred_check
      %p125 = pneg %p124
    $region22: #{tpu_custom_call.1} parent=5 // pred_check_branch
      %127 = sbr.rel (%p125) target = $region24
    $region23: #{tpu_custom_call.1} parent=5 // pred_region
      // Predicated region
      $region25: #{tpu_custom_call.1} parent=23 // pred_check
        %p128 = pneg %p29
      $region26: #{tpu_custom_call.1} parent=23 // pred_check_branch
        %130 = sbr.rel (%p128) target = $region28
      $region27: #{tpu_custom_call.1} parent=23 // pred_region
        %p131 = scmp.lt.s32.totalorder %s9, 1
        %s132 = scalar_select %p131, %s9, 1
        %s133 = smul.addr %s132, 128
        %s134 = smul.addr %s133, 8
        %s135 = scalar_lea.vmem %s0, %s134
      $region28: #{tpu_custom_call.1} parent=23 // pred_fallthru
        _
    $region24: #{tpu_custom_call.1} parent=5 // pred_fallthru
      _
    %p136 = scmp.le.s32.totalorder 1, %s9
    %p137 = scmp.lt.s32.totalorder %s9, 3
    %p138 = pnand %p136, %p137
    %p139 = pneg %p138
    // Predicated region
    $region29: #{tpu_custom_call.1} parent=5 // pred_check
      _
    $region30: #{tpu_custom_call.1} parent=5 // pred_check_branch
      %141 = sbr.rel (%p138) target = $region32
    $region31: #{tpu_custom_call.1} parent=5 // pred_region
      %s142 = ssub.s32 %s9, 1
      %p143 = scmp.lt.s32.totalorder %s14, 1
      %s144 = scalar_select %p143, %s14, 1
      %s145 = smul.addr %s144, 128
      %s146 = smul.addr %s145, 8
      %s147 = scalar_lea.vmem %s0, %s146
      %p148 = pneg %p35
      %p149 = pneg %p32
      %p150 = pneg %p56
      %p151 = pneg %p53
      %p152 = pneg %p77
      %p153 = pneg %p74
      %p154 = pneg %p103
      %p155 = pneg %p100
      %p156 = scmp.lt.s32.totalorder %s14, 1
      %s157 = scalar_select %p156, %s14, 1
      %s158 = smul.addr %s157, 128
      %s159 = smul.addr %s158, 8
      %s160 = scalar_lea.vmem %s3, %s159
      %p161 = scmp.lt.s32.totalorder %s14, 1
      %s162 = scalar_select %p161, %s14, 1
      %s163 = smul.addr %s162, 128
      %s164 = smul.addr %s163, 8
      %s165 = scalar_lea.vmem %s0, %s164
      %p166 = scmp.lt.s32.totalorder %s14, 1
      %s167 = scalar_select %p166, %s14, 1
      %s168 = smul.addr %s167, 128
      %s169 = smul.addr %s168, 8
      %s170 = scalar_lea.vmem %s3, %s169
      %v172 = vld [vmem:[%s165] sm:$0xff]
      %v173 = vld [vmem:[%s165 + $0x8] sm:$0xff]
      %v174 = vld [vmem:[%s165 + $0x10] sm:$0xff]
      %v175 = vld [vmem:[%s165 + $0x18] sm:$0xff]
      %v176 = vld [vmem:[%s165 + $0x20] sm:$0xff]
      %v177 = vld [vmem:[%s165 + $0x28] sm:$0xff]
      %v178 = vld [vmem:[%s165 + $0x30] sm:$0xff]
      %v179 = vld [vmem:[%s165 + $0x38] sm:$0xff]
      %v180 = vld [vmem:[%s165 + $0x40] sm:$0xff]
      %v181 = vld [vmem:[%s165 + $0x48] sm:$0xff]
      %v182 = vld [vmem:[%s165 + $0x50] sm:$0xff]
      %v183 = vld [vmem:[%s165 + $0x58] sm:$0xff]
      %v184 = vld [vmem:[%s165 + $0x60] sm:$0xff]
      %v185 = vld [vmem:[%s165 + $0x68] sm:$0xff]
      %v186 = vld [vmem:[%s165 + $0x70] sm:$0xff]
      %v187 = vld [vmem:[%s165 + $0x78] sm:$0xff]
      %v188 = vld [vmem:[%s165 + $0x80] sm:$0xff]
      %v189 = vld [vmem:[%s165 + $0x88] sm:$0xff]
      %v190 = vld [vmem:[%s165 + $0x90] sm:$0xff]
      %v191 = vld [vmem:[%s165 + $0x98] sm:$0xff]
      %v192 = vld [vmem:[%s165 + $0xa0] sm:$0xff]
      %v193 = vld [vmem:[%s165 + $0xa8] sm:$0xff]
      %v194 = vld [vmem:[%s165 + $0xb0] sm:$0xff]
      %v195 = vld [vmem:[%s165 + $0xb8] sm:$0xff]
      %v196 = vld [vmem:[%s165 + $0xc0] sm:$0xff]
      %v197 = vld [vmem:[%s165 + $0xc8] sm:$0xff]
      %v198 = vld [vmem:[%s165 + $0xd0] sm:$0xff]
      %v199 = vld [vmem:[%s165 + $0xd8] sm:$0xff]
      %v200 = vld [vmem:[%s165 + $0xe0] sm:$0xff]
      %v201 = vld [vmem:[%s165 + $0xe8] sm:$0xff]
      %v202 = vld [vmem:[%s165 + $0xf0] sm:$0xff]
      %v203 = vld [vmem:[%s165 + $0xf8] sm:$0xff]
      %v204 = vld [vmem:[%s165 + $0x100] sm:$0xff]
      %v205 = vld [vmem:[%s165 + $0x108] sm:$0xff]
      %v206 = vld [vmem:[%s165 + $0x110] sm:$0xff]
      %v207 = vld [vmem:[%s165 + $0x118] sm:$0xff]
      %v208 = vld [vmem:[%s165 + $0x120] sm:$0xff]
      %v209 = vld [vmem:[%s165 + $0x128] sm:$0xff]
      %v210 = vld [vmem:[%s165 + $0x130] sm:$0xff]
      %v211 = vld [vmem:[%s165 + $0x138] sm:$0xff]
      %v212 = vld [vmem:[%s165 + $0x140] sm:$0xff]
      %v213 = vld [vmem:[%s165 + $0x148] sm:$0xff]
      %v214 = vld [vmem:[%s165 + $0x150] sm:$0xff]
      %v215 = vld [vmem:[%s165 + $0x158] sm:$0xff]
      %v216 = vld [vmem:[%s165 + $0x160] sm:$0xff]
      %v217 = vld [vmem:[%s165 + $0x168] sm:$0xff]
      %v218 = vld [vmem:[%s165 + $0x170] sm:$0xff]
      %v219 = vld [vmem:[%s165 + $0x178] sm:$0xff]
      %v220 = vld [vmem:[%s165 + $0x180] sm:$0xff]
      %v221 = vld [vmem:[%s165 + $0x188] sm:$0xff]
      %v222 = vld [vmem:[%s165 + $0x190] sm:$0xff]
      %v223 = vld [vmem:[%s165 + $0x198] sm:$0xff]
      %v224 = vld [vmem:[%s165 + $0x1a0] sm:$0xff]
      %v225 = vld [vmem:[%s165 + $0x1a8] sm:$0xff]
      %v226 = vld [vmem:[%s165 + $0x1b0] sm:$0xff]
      %v227 = vld [vmem:[%s165 + $0x1b8] sm:$0xff]
      %v228 = vld [vmem:[%s165 + $0x1c0] sm:$0xff]
      %v229 = vld [vmem:[%s165 + $0x1c8] sm:$0xff]
      %v230 = vld [vmem:[%s165 + $0x1d0] sm:$0xff]
      %v231 = vld [vmem:[%s165 + $0x1d8] sm:$0xff]
      %v232 = vld [vmem:[%s165 + $0x1e0] sm:$0xff]
      %v233 = vld [vmem:[%s165 + $0x1e8] sm:$0xff]
      %v234 = vld [vmem:[%s165 + $0x1f0] sm:$0xff]
      %v235 = vld [vmem:[%s165 + $0x1f8] sm:$0xff]
      %v236 = vld [vmem:[%s165 + $0x200] sm:$0xff]
      %v237 = vld [vmem:[%s165 + $0x208] sm:$0xff]
      %v238 = vld [vmem:[%s165 + $0x210] sm:$0xff]
      %v239 = vld [vmem:[%s165 + $0x218] sm:$0xff]
      %v240 = vld [vmem:[%s165 + $0x220] sm:$0xff]
      %v241 = vld [vmem:[%s165 + $0x228] sm:$0xff]
      %v242 = vld [vmem:[%s165 + $0x230] sm:$0xff]
      %v243 = vld [vmem:[%s165 + $0x238] sm:$0xff]
      %v244 = vld [vmem:[%s165 + $0x240] sm:$0xff]
      %v245 = vld [vmem:[%s165 + $0x248] sm:$0xff]
      %v246 = vld [vmem:[%s165 + $0x250] sm:$0xff]
      %v247 = vld [vmem:[%s165 + $0x258] sm:$0xff]
      %v248 = vld [vmem:[%s165 + $0x260] sm:$0xff]
      %v249 = vld [vmem:[%s165 + $0x268] sm:$0xff]
      %v250 = vld [vmem:[%s165 + $0x270] sm:$0xff]
      %v251 = vld [vmem:[%s165 + $0x278] sm:$0xff]
      %v252 = vld [vmem:[%s165 + $0x280] sm:$0xff]
      %v253 = vld [vmem:[%s165 + $0x288] sm:$0xff]
      %v254 = vld [vmem:[%s165 + $0x290] sm:$0xff]
      %v255 = vld [vmem:[%s165 + $0x298] sm:$0xff]
      %v256 = vld [vmem:[%s165 + $0x2a0] sm:$0xff]
      %v257 = vld [vmem:[%s165 + $0x2a8] sm:$0xff]
      %v258 = vld [vmem:[%s165 + $0x2b0] sm:$0xff]
      %v259 = vld [vmem:[%s165 + $0x2b8] sm:$0xff]
      %v260 = vld [vmem:[%s165 + $0x2c0] sm:$0xff]
      %v261 = vld [vmem:[%s165 + $0x2c8] sm:$0xff]
      %v262 = vld [vmem:[%s165 + $0x2d0] sm:$0xff]
      %v263 = vld [vmem:[%s165 + $0x2d8] sm:$0xff]
      %v264 = vld [vmem:[%s165 + $0x2e0] sm:$0xff]
      %v265 = vld [vmem:[%s165 + $0x2e8] sm:$0xff]
      %v266 = vld [vmem:[%s165 + $0x2f0] sm:$0xff]
      %v267 = vld [vmem:[%s165 + $0x2f8] sm:$0xff]
      %v268 = vld [vmem:[%s165 + $0x300] sm:$0xff]
      %v269 = vld [vmem:[%s165 + $0x308] sm:$0xff]
      %v270 = vld [vmem:[%s165 + $0x310] sm:$0xff]
      %v271 = vld [vmem:[%s165 + $0x318] sm:$0xff]
      %v272 = vld [vmem:[%s165 + $0x320] sm:$0xff]
      %v273 = vld [vmem:[%s165 + $0x328] sm:$0xff]
      %v274 = vld [vmem:[%s165 + $0x330] sm:$0xff]
      %v275 = vld [vmem:[%s165 + $0x338] sm:$0xff]
      %v276 = vld [vmem:[%s165 + $0x340] sm:$0xff]
      %v277 = vld [vmem:[%s165 + $0x348] sm:$0xff]
      %v278 = vld [vmem:[%s165 + $0x350] sm:$0xff]
      %v279 = vld [vmem:[%s165 + $0x358] sm:$0xff]
      %v280 = vld [vmem:[%s165 + $0x360] sm:$0xff]
      %v281 = vld [vmem:[%s165 + $0x368] sm:$0xff]
      %v282 = vld [vmem:[%s165 + $0x370] sm:$0xff]
      %v283 = vld [vmem:[%s165 + $0x378] sm:$0xff]
      %v284 = vld [vmem:[%s165 + $0x380] sm:$0xff]
      %v285 = vld [vmem:[%s165 + $0x388] sm:$0xff]
      %v286 = vld [vmem:[%s165 + $0x390] sm:$0xff]
      %v287 = vld [vmem:[%s165 + $0x398] sm:$0xff]
      %v288 = vld [vmem:[%s165 + $0x3a0] sm:$0xff]
      %v289 = vld [vmem:[%s165 + $0x3a8] sm:$0xff]
      %v290 = vld [vmem:[%s165 + $0x3b0] sm:$0xff]
      %v291 = vld [vmem:[%s165 + $0x3b8] sm:$0xff]
      %v292 = vld [vmem:[%s165 + $0x3c0] sm:$0xff]
      %v293 = vld [vmem:[%s165 + $0x3c8] sm:$0xff]
      %v294 = vld [vmem:[%s165 + $0x3d0] sm:$0xff]
      %v295 = vld [vmem:[%s165 + $0x3d8] sm:$0xff]
      %v296 = vld [vmem:[%s165 + $0x3e0] sm:$0xff]
      %v297 = vld [vmem:[%s165 + $0x3e8] sm:$0xff]
      %v298 = vld [vmem:[%s165 + $0x3f0] sm:$0xff]
      %v299 = vld [vmem:[%s165 + $0x3f8] sm:$0xff]
      %v300 = vpack.c.bf16 %v173, %v172
      %v301 = vpack.c.bf16 %v175, %v174
      %v302 = vpack.c.bf16 %v177, %v176
      %v303 = vpack.c.bf16 %v179, %v178
      %v304 = vpack.c.bf16 %v181, %v180
      %v305 = vpack.c.bf16 %v183, %v182
      %v306 = vpack.c.bf16 %v185, %v184
      %v307 = vpack.c.bf16 %v187, %v186
      %v308 = vpack.c.bf16 %v189, %v188
      %v309 = vpack.c.bf16 %v191, %v190
      %v310 = vpack.c.bf16 %v193, %v192
      %v311 = vpack.c.bf16 %v195, %v194
      %v312 = vpack.c.bf16 %v197, %v196
      %v313 = vpack.c.bf16 %v199, %v198
      %v314 = vpack.c.bf16 %v201, %v200
      %v315 = vpack.c.bf16 %v203, %v202
      %v316 = vpack.c.bf16 %v205, %v204
      %v317 = vpack.c.bf16 %v207, %v206
      %v318 = vpack.c.bf16 %v209, %v208
      %v319 = vpack.c.bf16 %v211, %v210
      %v320 = vpack.c.bf16 %v213, %v212
      %v321 = vpack.c.bf16 %v215, %v214
      %v322 = vpack.c.bf16 %v217, %v216
      %v323 = vpack.c.bf16 %v219, %v218
      %v324 = vpack.c.bf16 %v221, %v220
      %v325 = vpack.c.bf16 %v223, %v222
      %v326 = vpack.c.bf16 %v225, %v224
      %v327 = vpack.c.bf16 %v227, %v226
      %v328 = vpack.c.bf16 %v229, %v228
      %v329 = vpack.c.bf16 %v231, %v230
      %v330 = vpack.c.bf16 %v233, %v232
      %v331 = vpack.c.bf16 %v235, %v234
      %v332 = vpack.c.bf16 %v237, %v236
      %v333 = vpack.c.bf16 %v239, %v238
      %v334 = vpack.c.bf16 %v241, %v240
      %v335 = vpack.c.bf16 %v243, %v242
      %v336 = vpack.c.bf16 %v245, %v244
      %v337 = vpack.c.bf16 %v247, %v246
      %v338 = vpack.c.bf16 %v249, %v248
      %v339 = vpack.c.bf16 %v251, %v250
      %v340 = vpack.c.bf16 %v253, %v252
      %v341 = vpack.c.bf16 %v255, %v254
      %v342 = vpack.c.bf16 %v257, %v256
      %v343 = vpack.c.bf16 %v259, %v258
      %v344 = vpack.c.bf16 %v261, %v260
      %v345 = vpack.c.bf16 %v263, %v262
      %v346 = vpack.c.bf16 %v265, %v264
      %v347 = vpack.c.bf16 %v267, %v266
      %v348 = vpack.c.bf16 %v269, %v268
      %v349 = vpack.c.bf16 %v271, %v270
      %v350 = vpack.c.bf16 %v273, %v272
      %v351 = vpack.c.bf16 %v275, %v274
      %v352 = vpack.c.bf16 %v277, %v276
      %v353 = vpack.c.bf16 %v279, %v278
      %v354 = vpack.c.bf16 %v281, %v280
      %v355 = vpack.c.bf16 %v283, %v282
      %v356 = vpack.c.bf16 %v285, %v284
      %v357 = vpack.c.bf16 %v287, %v286
      %v358 = vpack.c.bf16 %v289, %v288
      %v359 = vpack.c.bf16 %v291, %v290
      %v360 = vpack.c.bf16 %v293, %v292
      %v361 = vpack.c.bf16 %v295, %v294
      %v362 = vpack.c.bf16 %v297, %v296
      %v363 = vpack.c.bf16 %v299, %v298
      %v364 = vld [vmem:[%s1] sm:$0xf]
      %v365 = vld [vmem:[%s1 + $0x4] sm:$0xf]
      %v366 = vld [vmem:[%s1 + $0x8] sm:$0xf]
      %v367 = vld [vmem:[%s1 + $0xc] sm:$0x3]
      %v368 = vld [vmem:[%s2] sm:$0x1]
      %v370 = vlaneseq
      %v371 = vshrl.u32 %v370, 7
      %v372 = vsub.s32 0, %v371
      %v373 = vrot.slane %v368, %v372
      %v379 = vunpack.c.l.b16 %v364
      %v380 = vunpack.c.l.b16 %v365
      %v381 = vunpack.c.l.b16 %v366
      %v382 = vunpack.c.l.b16 %v367
      %v383 = vpack.c.b16 %v380, %v379
      %v384 = vpack.c.b16 %v382, %v381
      %vm386 = vcmask 220160
      %v388 = vsel %vm386, %v300, 0
      %v391 = vsel %vm386, %v301, 0
      %v394 = vsel %vm386, %v302, 0
      %v397 = vsel %vm386, %v303, 0
      %v400 = vsel %vm386, %v304, 0
      %v403 = vsel %vm386, %v305, 0
      %v406 = vsel %vm386, %v306, 0
      %v409 = vsel %vm386, %v307, 0
      %v412 = vsel %vm386, %v308, 0
      %v415 = vsel %vm386, %v309, 0
      %v418 = vsel %vm386, %v310, 0
      %v421 = vsel %vm386, %v311, 0
      %v424 = vsel %vm386, %v312, 0
      %v427 = vsel %vm386, %v313, 0
      %v430 = vsel %vm386, %v314, 0
      %v433 = vsel %vm386, %v315, 0
      %v436 = vsel %vm386, %v316, 0
      %v439 = vsel %vm386, %v317, 0
      %v442 = vsel %vm386, %v318, 0
      %v445 = vsel %vm386, %v319, 0
      %v448 = vsel %vm386, %v320, 0
      %v451 = vsel %vm386, %v321, 0
      %v454 = vsel %vm386, %v322, 0
      %v457 = vsel %vm386, %v323, 0
      %v460 = vsel %vm386, %v324, 0
      %v463 = vsel %vm386, %v325, 0
      %v466 = vsel %vm386, %v326, 0
      %v469 = vsel %vm386, %v327, 0
      %v472 = vsel %vm386, %v328, 0
      %v475 = vsel %vm386, %v329, 0
      %v478 = vsel %vm386, %v330, 0
      %v481 = vsel %vm386, %v331, 0
      %v484 = vsel %vm386, %v332, 0
      %v487 = vsel %vm386, %v333, 0
      %v490 = vsel %vm386, %v334, 0
      %v493 = vsel %vm386, %v335, 0
      %v496 = vsel %vm386, %v336, 0
      %v499 = vsel %vm386, %v337, 0
      %v502 = vsel %vm386, %v338, 0
      %v505 = vsel %vm386, %v339, 0
      %v508 = vsel %vm386, %v340, 0
      %v511 = vsel %vm386, %v341, 0
      %v514 = vsel %vm386, %v342, 0
      %v517 = vsel %vm386, %v343, 0
      %v520 = vsel %vm386, %v344, 0
      %v523 = vsel %vm386, %v345, 0
      %v526 = vsel %vm386, %v346, 0
      %v529 = vsel %vm386, %v347, 0
      %v532 = vsel %vm386, %v348, 0
      %v535 = vsel %vm386, %v349, 0
      %v538 = vsel %vm386, %v350, 0
      %v541 = vsel %vm386, %v351, 0
      %v544 = vsel %vm386, %v352, 0
      %v547 = vsel %vm386, %v353, 0
      %v550 = vsel %vm386, %v354, 0
      %v553 = vsel %vm386, %v355, 0
      %v556 = vsel %vm386, %v356, 0
      %v559 = vsel %vm386, %v357, 0
      %v562 = vsel %vm386, %v358, 0
      %v565 = vsel %vm386, %v359, 0
      %v568 = vsel %vm386, %v360, 0
      %v571 = vsel %vm386, %v361, 0
      %v574 = vsel %vm386, %v362, 0
      %v577 = vsel %vm386, %v363, 0
      %vm579 = vcmask 1044480
      %vm580 = vcmask 1045504
      %v581 = vsel %vm579, 4294967295, 65535
      %v582 = vsel %vm580, %v581, 0
      %v584 = vand.u32 %v384, %v582
      %586 = vmatprep.subr.bf16.mxu0 0
      %587 = vmatpush1.bf16.msra.mxu0 %v383
      %588 = vmatprep.subr.bf16.mxu0 0
      %589 = vmatpush1.bf16.msra.mxu0 %v584
      %590 = vmatprep.subr.bf16.mxu0 0
      %591 = vmatpush1.bf16.msra.mxu0 0
      %592 = vmatprep.subr.bf16.mxu0 0
      %593 = vmatpush1.bf16.msra.mxu0 0
      %594 = vmatprep.subr.bf16.mxu0 0
      %595 = vmatpush1.bf16.msra.mxu0 0
      %596 = vmatprep.subr.bf16.mxu0 0
      %597 = vmatpush1.bf16.msra.mxu0 0
      %598 = vmatprep.subr.bf16.mxu0 0
      %599 = vmatpush1.bf16.msra.mxu0 0
      %600 = vmatprep.subr.bf16.mxu0 0
      %601 = vmatpush1.bf16.msra.mxu0 0
      %602 = vmatprep.subr.bf16.mxu0 0
      %603 = vmatpush1.bf16.msra.mxu0 0
      %604 = vmatprep.subr.bf16.mxu0 0
      %605 = vmatpush1.bf16.msra.mxu0 0
      %606 = vmatprep.subr.bf16.mxu0 0
      %607 = vmatpush1.bf16.msra.mxu0 0
      %608 = vmatprep.subr.bf16.mxu0 0
      %609 = vmatpush1.bf16.msra.mxu0 0
      %610 = vmatprep.subr.bf16.mxu0 0
      %611 = vmatpush1.bf16.msra.mxu0 0
      %612 = vmatprep.subr.bf16.mxu0 0
      %613 = vmatpush1.bf16.msra.mxu0 0
      %614 = vmatprep.subr.bf16.mxu0 0
      %615 = vmatpush1.bf16.msra.mxu0 0
      %616 = vmatprep.subr.bf16.mxu0 0
      %617 = vmatpush1.bf16.msra.mxu0 0
      %618 = vmatprep.mubr.bf16.mxu0 0
      %619 = vmatmul.mubr.bf16.gmra.mrb[0].mxu0 %v388
      %v620 = vpop.f32.mrb[0].mxu0
      %v621 = vadd.f32 %v373, %v620
      %v622 = vpop.f32.mrb[0].mxu0
      %v623 = vpop.f32.mrb[0].mxu0
      %v624 = vadd.f32 %v373, %v623
      %v625 = vpop.f32.mrb[0].mxu0
      %626 = vmatprep.mubr.bf16.mxu0 0
      %627 = vmatmul.mubr.bf16.gmra.mrb[0].mxu0 %v391
      %v628 = vpop.f32.mrb[0].mxu0
      %v629 = vadd.f32 %v373, %v628
      %v630 = vpop.f32.mrb[0].mxu0
      %v631 = vpop.f32.mrb[0].mxu0
      %v632 = vadd.f32 %v373, %v631
      %v633 = vpop.f32.mrb[0].mxu0
      %634 = vmatprep.mubr.bf16.mxu0 0
      %635 = vmatmul.mubr.bf16.gmra.mrb[0].mxu0 %v394
      %v636 = vpop.f32.mrb[0].mxu0
      %v637 = vadd.f32 %v373, %v636
      %v638 = vpop.f32.mrb[0].mxu0
      %v639 = vpop.f32.mrb[0].mxu0
      %v640 = vadd.f32 %v373, %v639
      %v641 = vpop.f32.mrb[0].mxu0
      %642 = vmatprep.mubr.bf16.mxu0 0
      %643 = vmatmul.mubr.bf16.gmra.mrb[0].mxu0 %v397
      %v644 = vpop.f32.mrb[0].mxu0
      %v645 = vadd.f32 %v373, %v644
      %v646 = vpop.f32.mrb[0].mxu0
      %v647 = vpop.f32.mrb[0].mxu0
      %v648 = vadd.f32 %v373, %v647
      %v649 = vpop.f32.mrb[0].mxu0
      %650 = vmatprep.mubr.bf16.mxu0 0
      %651 = vmatmul.mubr.bf16.gmra.mrb[0].mxu0 %v400
      %v652 = vpop.f32.mrb[0].mxu0
      %v653 = vadd.f32 %v373, %v652
      %v654 = vpop.f32.mrb[0].mxu0
      %v655 = vpop.f32.mrb[0].mxu0
      %v656 = vadd.f32 %v373, %v655
      %v657 = vpop.f32.mrb[0].mxu0
      %658 = vmatprep.mubr.bf16.mxu0 0
      %659 = vmatmul.mubr.bf16.gmra.mrb[0].mxu0 %v403
      %v660 = vpop.f32.mrb[0].mxu0
      %v661 = vadd.f32 %v373, %v660
      %v662 = vpop.f32.mrb[0].mxu0
      %v663 = vpop.f32.mrb[0].mxu0
      %v664 = vadd.f32 %v373, %v663
      %v665 = vpop.f32.mrb[0].mxu0
      %666 = vmatprep.mubr.bf16.mxu0 0
      %667 = vmatmul.mubr.bf16.gmra.mrb[0].mxu0 %v406
      %v668 = vpop.f32.mrb[0].mxu0
      %v669 = vadd.f32 %v373, %v668
      %v670 = vpop.f32.mrb[0].mxu0
      %v671 = vpop.f32.mrb[0].mxu0
      %v672 = vadd.f32 %v373, %v671
      %v673 = vpop.f32.mrb[0].mxu0
      %674 = vmatprep.mubr.bf16.mxu0 0
      %675 = vmatmul.mubr.bf16.gmra.mrb[0].mxu0 %v409
      %v676 = vpop.f32.mrb[0].mxu0
      %v677 = vadd.f32 %v373, %v676
      %v678 = vpop.f32.mrb[0].mxu0
      %v679 = vpop.f32.mrb[0].mxu0
      %v680 = vadd.f32 %v373, %v679
      %v681 = vpop.f32.mrb[0].mxu0
      %682 = vmatprep.mubr.bf16.mxu0 0
      %683 = vmatmul.mubr.bf16.gmra.mrb[0].mxu0 %v412
      %v684 = vpop.f32.mrb[0].mxu0
      %v685 = vadd.f32 %v373, %v684
      %v686 = vpop.f32.mrb[0].mxu0
      %v687 = vpop.f32.mrb[0].mxu0
      %v688 = vadd.f32 %v373, %v687
      %v689 = vpop.f32.mrb[0].mxu0
      %690 = vmatprep.mubr.bf16.mxu0 0
      %691 = vmatmul.mubr.bf16.gmra.mrb[0].mxu0 %v415
      %v692 = vpop.f32.mrb[0].mxu0
      %v693 = vadd.f32 %v373, %v692
      %v694 = vpop.f32.mrb[0].mxu0
      %v695 = vpop.f32.mrb[0].mxu0
      %v696 = vadd.f32 %v373, %v695
      %v697 = vpop.f32.mrb[0].mxu0
      %698 = vmatprep.mubr.bf16.mxu0 0
      %699 = vmatmul.mubr.bf16.gmra.mrb[0].mxu0 %v418
      %v700 = vpop.f32.mrb[0].mxu0
      %v701 = vadd.f32 %v373, %v700
      %v702 = vpop.f32.mrb[0].mxu0
      %v703 = vpop.f32.mrb[0].mxu0
      %v704 = vadd.f32 %v373, %v703
      %v705 = vpop.f32.mrb[0].mxu0
      %706 = vmatprep.mubr.bf16.mxu0 0
      %707 = vmatmul.mubr.bf16.gmra.mrb[0].mxu0 %v421
      %v708 = vpop.f32.mrb[0].mxu0
      %v709 = vadd.f32 %v373, %v708
      %v710 = vpop.f32.mrb[0].mxu0
      %v711 = vpop.f32.mrb[0].mxu0
      %v712 = vadd.f32 %v373, %v711
      %v713 = vpop.f32.mrb[0].mxu0
      %714 = vmatprep.mubr.bf16.mxu0 0
      %715 = vmatmul.mubr.bf16.gmra.mrb[0].mxu0 %v424
      %v716 = vpop.f32.mrb[0].mxu0
      %v717 = vadd.f32 %v373, %v716
      %v718 = vpop.f32.mrb[0].mxu0
      %v719 = vpop.f32.mrb[0].mxu0
      %v720 = vadd.f32 %v373, %v719
      %v721 = vpop.f32.mrb[0].mxu0
      %722 = vmatprep.mubr.bf16.mxu0 0
      %723 = vmatmul.mubr.bf16.gmra.mrb[0].mxu0 %v427
      %v724 = vpop.f32.mrb[0].mxu0
      %v725 = vadd.f32 %v373, %v724
      %v726 = vpop.f32.mrb[0].mxu0
      %v727 = vpop.f32.mrb[0].mxu0
      %v728 = vadd.f32 %v373, %v727
      %v729 = vpop.f32.mrb[0].mxu0
      %730 = vmatprep.mubr.bf16.mxu0 0
      %731 = vmatmul.mubr.bf16.gmra.mrb[0].mxu0 %v430
      %v732 = vpop.f32.mrb[0].mxu0
      %v733 = vadd.f32 %v373, %v732
      %v734 = vpop.f32.mrb[0].mxu0
      %v735 = vpop.f32.mrb[0].mxu0
      %v736 = vadd.f32 %v373, %v735
      %v737 = vpop.f32.mrb[0].mxu0
      %738 = vmatprep.mubr.bf16.mxu0 0
      %739 = vmatmul.mubr.bf16.gmra.mrb[0].mxu0 %v433
      %v740 = vpop.f32.mrb[0].mxu0
      %v741 = vadd.f32 %v373, %v740
      %v742 = vpop.f32.mrb[0].mxu0
      %v743 = vpop.f32.mrb[0].mxu0
      %v744 = vadd.f32 %v373, %v743
      %v745 = vpop.f32.mrb[0].mxu0
      %746 = vmatprep.mubr.bf16.mxu0 0
      %747 = vmatmul.mubr.bf16.gmra.mrb[0].mxu0 %v436
      %v748 = vpop.f32.mrb[0].mxu0
      %v749 = vadd.f32 %v373, %v748
      %v750 = vpop.f32.mrb[0].mxu0
      %v751 = vpop.f32.mrb[0].mxu0
      %v752 = vadd.f32 %v373, %v751
      %v753 = vpop.f32.mrb[0].mxu0
      %754 = vmatprep.mubr.bf16.mxu0 0
      %755 = vmatmul.mubr.bf16.gmra.mrb[0].mxu0 %v439
      %v756 = vpop.f32.mrb[0].mxu0
      %v757 = vadd.f32 %v373, %v756
      %v758 = vpop.f32.mrb[0].mxu0
      %v759 = vpop.f32.mrb[0].mxu0
      %v760 = vadd.f32 %v373, %v759
      %v761 = vpop.f32.mrb[0].mxu0
      %762 = vmatprep.mubr.bf16.mxu0 0
      %763 = vmatmul.mubr.bf16.gmra.mrb[0].mxu0 %v442
      %v764 = vpop.f32.mrb[0].mxu0
      %v765 = vadd.f32 %v373, %v764
      %v766 = vpop.f32.mrb[0].mxu0
      %v767 = vpop.f32.mrb[0].mxu0
      %v768 = vadd.f32 %v373, %v767
      %v769 = vpop.f32.mrb[0].mxu0
      %770 = vmatprep.mubr.bf16.mxu0 0
      %771 = vmatmul.mubr.bf16.gmra.mrb[0].mxu0 %v445
      %v772 = vpop.f32.mrb[0].mxu0
      %v773 = vadd.f32 %v373, %v772
      %v774 = vpop.f32.mrb[0].mxu0
      %v775 = vpop.f32.mrb[0].mxu0
      %v776 = vadd.f32 %v373, %v775
      %v777 = vpop.f32.mrb[0].mxu0
      %778 = vmatprep.mubr.bf16.mxu0 0
      %779 = vmatmul.mubr.bf16.gmra.mrb[0].mxu0 %v448
      %v780 = vpop.f32.mrb[0].mxu0
      %v781 = vadd.f32 %v373, %v780
      %v782 = vpop.f32.mrb[0].mxu0
      %v783 = vpop.f32.mrb[0].mxu0
      %v784 = vadd.f32 %v373, %v783
      %v785 = vpop.f32.mrb[0].mxu0
      %786 = vmatprep.mubr.bf16.mxu0 0
      %787 = vmatmul.mubr.bf16.gmra.mrb[0].mxu0 %v451
      %v788 = vpop.f32.mrb[0].mxu0
      %v789 = vadd.f32 %v373, %v788
      %v790 = vpop.f32.mrb[0].mxu0
      %v791 = vpop.f32.mrb[0].mxu0
      %v792 = vadd.f32 %v373, %v791
      %v793 = vpop.f32.mrb[0].mxu0
      %794 = vmatprep.mubr.bf16.mxu0 0
      %795 = vmatmul.mubr.bf16.gmra.mrb[0].mxu0 %v454
      %v796 = vpop.f32.mrb[0].mxu0
      %v797 = vadd.f32 %v373, %v796
      %v798 = vpop.f32.mrb[0].mxu0
      %v799 = vpop.f32.mrb[0].mxu0
      %v800 = vadd.f32 %v373, %v799
      %v801 = vpop.f32.mrb[0].mxu0
      %802 = vmatprep.mubr.bf16.mxu0 0
      %803 = vmatmul.mubr.bf16.gmra.mrb[0].mxu0 %v457
      %v804 = vpop.f32.mrb[0].mxu0
      %v805 = vadd.f32 %v373, %v804
      %v806 = vpop.f32.mrb[0].mxu0
      %v807 = vpop.f32.mrb[0].mxu0
      %v808 = vadd.f32 %v373, %v807
      %v809 = vpop.f32.mrb[0].mxu0
      %810 = vmatprep.mubr.bf16.mxu0 0
      %811 = vmatmul.mubr.bf16.gmra.mrb[0].mxu0 %v460
      %v812 = vpop.f32.mrb[0].mxu0
      %v813 = vadd.f32 %v373, %v812
      %v814 = vpop.f32.mrb[0].mxu0
      %v815 = vpop.f32.mrb[0].mxu0
      %v816 = vadd.f32 %v373, %v815
      %v817 = vpop.f32.mrb[0].mxu0
      %818 = vmatprep.mubr.bf16.mxu0 0
      %819 = vmatmul.mubr.bf16.gmra.mrb[0].mxu0 %v463
      %v820 = vpop.f32.mrb[0].mxu0
      %v821 = vadd.f32 %v373, %v820
      %v822 = vpop.f32.mrb[0].mxu0
      %v823 = vpop.f32.mrb[0].mxu0
      %v824 = vadd.f32 %v373, %v823
      %v825 = vpop.f32.mrb[0].mxu0
      %826 = vmatprep.mubr.bf16.mxu0 0
      %827 = vmatmul.mubr.bf16.gmra.mrb[0].mxu0 %v466
      %v828 = vpop.f32.mrb[0].mxu0
      %v829 = vadd.f32 %v373, %v828
      %v830 = vpop.f32.mrb[0].mxu0
      %v831 = vpop.f32.mrb[0].mxu0
      %v832 = vadd.f32 %v373, %v831
      %v833 = vpop.f32.mrb[0].mxu0
      %834 = vmatprep.mubr.bf16.mxu0 0
      %835 = vmatmul.mubr.bf16.gmra.mrb[0].mxu0 %v469
      %v836 = vpop.f32.mrb[0].mxu0
      %v837 = vadd.f32 %v373, %v836
      %v838 = vpop.f32.mrb[0].mxu0
      %v839 = vpop.f32.mrb[0].mxu0
      %v840 = vadd.f32 %v373, %v839
      %v841 = vpop.f32.mrb[0].mxu0
      %842 = vmatprep.mubr.bf16.mxu0 0
      %843 = vmatmul.mubr.bf16.gmra.mrb[0].mxu0 %v472
      %v844 = vpop.f32.mrb[0].mxu0
      %v845 = vadd.f32 %v373, %v844
      %v846 = vpop.f32.mrb[0].mxu0
      %v847 = vpop.f32.mrb[0].mxu0
      %v848 = vadd.f32 %v373, %v847
      %v849 = vpop.f32.mrb[0].mxu0
      %850 = vmatprep.mubr.bf16.mxu0 0
      %851 = vmatmul.mubr.bf16.gmra.mrb[0].mxu0 %v475
      %v852 = vpop.f32.mrb[0].mxu0
      %v853 = vadd.f32 %v373, %v852
      %v854 = vpop.f32.mrb[0].mxu0
      %v855 = vpop.f32.mrb[0].mxu0
      %v856 = vadd.f32 %v373, %v855
      %v857 = vpop.f32.mrb[0].mxu0
      %858 = vmatprep.mubr.bf16.mxu0 0
      %859 = vmatmul.mubr.bf16.gmra.mrb[0].mxu0 %v478
      %v860 = vpop.f32.mrb[0].mxu0
      %v861 = vadd.f32 %v373, %v860
      %v862 = vpop.f32.mrb[0].mxu0
      %v863 = vpop.f32.mrb[0].mxu0
      %v864 = vadd.f32 %v373, %v863
      %v865 = vpop.f32.mrb[0].mxu0
      %866 = vmatprep.mubr.bf16.mxu0 0
      %867 = vmatmul.mubr.bf16.gmra.mrb[0].mxu0 %v481
      %v868 = vpop.f32.mrb[0].mxu0
      %v869 = vadd.f32 %v373, %v868
      %v870 = vpop.f32.mrb[0].mxu0
      %v871 = vpop.f32.mrb[0].mxu0
      %v872 = vadd.f32 %v373, %v871
      %v873 = vpop.f32.mrb[0].mxu0
      %874 = vmatprep.mubr.bf16.mxu0 0
      %875 = vmatmul.mubr.bf16.gmra.mrb[0].mxu0 %v484
      %v876 = vpop.f32.mrb[0].mxu0
      %v877 = vadd.f32 %v373, %v876
      %v878 = vpop.f32.mrb[0].mxu0
      %v879 = vpop.f32.mrb[0].mxu0
      %v880 = vadd.f32 %v373, %v879
      %v881 = vpop.f32.mrb[0].mxu0
      %882 = vmatprep.mubr.bf16.mxu0 0
      %883 = vmatmul.mubr.bf16.gmra.mrb[0].mxu0 %v487
      %v884 = vpop.f32.mrb[0].mxu0
      %v885 = vadd.f32 %v373, %v884
      %v886 = vpop.f32.mrb[0].mxu0
      %v887 = vpop.f32.mrb[0].mxu0
      %v888 = vadd.f32 %v373, %v887
      %v889 = vpop.f32.mrb[0].mxu0
      %890 = vmatprep.mubr.bf16.mxu0 0
      %891 = vmatmul.mubr.bf16.gmra.mrb[0].mxu0 %v490
      %v892 = vpop.f32.mrb[0].mxu0
      %v893 = vadd.f32 %v373, %v892
      %v894 = vpop.f32.mrb[0].mxu0
      %v895 = vpop.f32.mrb[0].mxu0
      %v896 = vadd.f32 %v373, %v895
      %v897 = vpop.f32.mrb[0].mxu0
      %898 = vmatprep.mubr.bf16.mxu0 0
      %899 = vmatmul.mubr.bf16.gmra.mrb[0].mxu0 %v493
      %v900 = vpop.f32.mrb[0].mxu0
      %v901 = vadd.f32 %v373, %v900
      %v902 = vpop.f32.mrb[0].mxu0
      %v903 = vpop.f32.mrb[0].mxu0
      %v904 = vadd.f32 %v373, %v903
      %v905 = vpop.f32.mrb[0].mxu0
      %906 = vmatprep.mubr.bf16.mxu0 0
      %907 = vmatmul.mubr.bf16.gmra.mrb[0].mxu0 %v496
      %v908 = vpop.f32.mrb[0].mxu0
      %v909 = vadd.f32 %v373, %v908
      %v910 = vpop.f32.mrb[0].mxu0
      %v911 = vpop.f32.mrb[0].mxu0
      %v912 = vadd.f32 %v373, %v911
      %v913 = vpop.f32.mrb[0].mxu0
      %914 = vmatprep.mubr.bf16.mxu0 0
      %915 = vmatmul.mubr.bf16.gmra.mrb[0].mxu0 %v499
      %v916 = vpop.f32.mrb[0].mxu0
      %v917 = vadd.f32 %v373, %v916
      %v918 = vpop.f32.mrb[0].mxu0
      %v919 = vpop.f32.mrb[0].mxu0
      %v920 = vadd.f32 %v373, %v919
      %v921 = vpop.f32.mrb[0].mxu0
      %922 = vmatprep.mubr.bf16.mxu0 0
      %923 = vmatmul.mubr.bf16.gmra.mrb[0].mxu0 %v502
      %v924 = vpop.f32.mrb[0].mxu0
      %v925 = vadd.f32 %v373, %v924
      %v926 = vpop.f32.mrb[0].mxu0
      %v927 = vpop.f32.mrb[0].mxu0
      %v928 = vadd.f32 %v373, %v927
      %v929 = vpop.f32.mrb[0].mxu0
      %930 = vmatprep.mubr.bf16.mxu0 0
      %931 = vmatmul.mubr.bf16.gmra.mrb[0].mxu0 %v505
      %v932 = vpop.f32.mrb[0].mxu0
      %v933 = vadd.f32 %v373, %v932
      %v934 = vpop.f32.mrb[0].mxu0
      %v935 = vpop.f32.mrb[0].mxu0
      %v936 = vadd.f32 %v373, %v935
      %v937 = vpop.f32.mrb[0].mxu0
      %938 = vmatprep.mubr.bf16.mxu0 0
      %939 = vmatmul.mubr.bf16.gmra.mrb[0].mxu0 %v508
      %v940 = vpop.f32.mrb[0].mxu0
      %v941 = vadd.f32 %v373, %v940
      %v942 = vpop.f32.mrb[0].mxu0
      %v943 = vpop.f32.mrb[0].mxu0
      %v944 = vadd.f32 %v373, %v943
      %v945 = vpop.f32.mrb[0].mxu0
      %946 = vmatprep.mubr.bf16.mxu0 0
      %947 = vmatmul.mubr.bf16.gmra.mrb[0].mxu0 %v511
      %v948 = vpop.f32.mrb[0].mxu0
      %v949 = vadd.f32 %v373, %v948
      %v950 = vpop.f32.mrb[0].mxu0
      %v951 = vpop.f32.mrb[0].mxu0
      %v952 = vadd.f32 %v373, %v951
      %v953 = vpop.f32.mrb[0].mxu0
      %954 = vmatprep.mubr.bf16.mxu0 0
      %955 = vmatmul.mubr.bf16.gmra.mrb[0].mxu0 %v514
      %v956 = vpop.f32.mrb[0].mxu0
      %v957 = vadd.f32 %v373, %v956
      %v958 = vpop.f32.mrb[0].mxu0
      %v959 = vpop.f32.mrb[0].mxu0
      %v960 = vadd.f32 %v373, %v959
      %v961 = vpop.f32.mrb[0].mxu0
      %962 = vmatprep.mubr.bf16.mxu0 0
      %963 = vmatmul.mubr.bf16.gmra.mrb[0].mxu0 %v517
      %v964 = vpop.f32.mrb[0].mxu0
      %v965 = vadd.f32 %v373, %v964
      %v966 = vpop.f32.mrb[0].mxu0
      %v967 = vpop.f32.mrb[0].mxu0
      %v968 = vadd.f32 %v373, %v967
      %v969 = vpop.f32.mrb[0].mxu0
      %970 = vmatprep.mubr.bf16.mxu0 0
      %971 = vmatmul.mubr.bf16.gmra.mrb[0].mxu0 %v520
      %v972 = vpop.f32.mrb[0].mxu0
      %v973 = vadd.f32 %v373, %v972
      %v974 = vpop.f32.mrb[0].mxu0
      %v975 = vpop.f32.mrb[0].mxu0
      %v976 = vadd.f32 %v373, %v975
      %v977 = vpop.f32.mrb[0].mxu0
      %978 = vmatprep.mubr.bf16.mxu0 0
      %979 = vmatmul.mubr.bf16.gmra.mrb[0].mxu0 %v523
      %v980 = vpop.f32.mrb[0].mxu0
      %v981 = vadd.f32 %v373, %v980
      %v982 = vpop.f32.mrb[0].mxu0
      %v983 = vpop.f32.mrb[0].mxu0
      %v984 = vadd.f32 %v373, %v983
      %v985 = vpop.f32.mrb[0].mxu0
      %986 = vmatprep.mubr.bf16.mxu0 0
      %987 = vmatmul.mubr.bf16.gmra.mrb[0].mxu0 %v526
      %v988 = vpop.f32.mrb[0].mxu0
      %v989 = vadd.f32 %v373, %v988
      %v990 = vpop.f32.mrb[0].mxu0
      %v991 = vpop.f32.mrb[0].mxu0
      %v992 = vadd.f32 %v373, %v991
      %v993 = vpop.f32.mrb[0].mxu0
      %994 = vmatprep.mubr.bf16.mxu0 0
      %995 = vmatmul.mubr.bf16.gmra.mrb[0].mxu0 %v529
      %v996 = vpop.f32.mrb[0].mxu0
      %v997 = vadd.f32 %v373, %v996
      %v998 = vpop.f32.mrb[0].mxu0
      %v999 = vpop.f32.mrb[0].mxu0
      %v1000 = vadd.f32 %v373, %v999
      %v1001 = vpop.f32.mrb[0].mxu0
      %1002 = vmatprep.mubr.bf16.mxu0 0
      %1003 = vmatmul.mubr.bf16.gmra.mrb[0].mxu0 %v532
      %v1004 = vpop.f32.mrb[0].mxu0
      %v1005 = vadd.f32 %v373, %v1004
      %v1006 = vpop.f32.mrb[0].mxu0
      %v1007 = vpop.f32.mrb[0].mxu0
      %v1008 = vadd.f32 %v373, %v1007
      %v1009 = vpop.f32.mrb[0].mxu0
      %1010 = vmatprep.mubr.bf16.mxu0 0
      %1011 = vmatmul.mubr.bf16.gmra.mrb[0].mxu0 %v535
      %v1012 = vpop.f32.mrb[0].mxu0
      %v1013 = vadd.f32 %v373, %v1012
      %v1014 = vpop.f32.mrb[0].mxu0
      %v1015 = vpop.f32.mrb[0].mxu0
      %v1016 = vadd.f32 %v373, %v1015
      %v1017 = vpop.f32.mrb[0].mxu0
      %1018 = vmatprep.mubr.bf16.mxu0 0
      %1019 = vmatmul.mubr.bf16.gmra.mrb[0].mxu0 %v538
      %v1020 = vpop.f32.mrb[0].mxu0
      %v1021 = vadd.f32 %v373, %v1020
      %v1022 = vpop.f32.mrb[0].mxu0
      %v1023 = vpop.f32.mrb[0].mxu0
      %v1024 = vadd.f32 %v373, %v1023
      %v1025 = vpop.f32.mrb[0].mxu0
      %1026 = vmatprep.mubr.bf16.mxu0 0
      %1027 = vmatmul.mubr.bf16.gmra.mrb[0].mxu0 %v541
      %v1028 = vpop.f32.mrb[0].mxu0
      %v1029 = vadd.f32 %v373, %v1028
      %v1030 = vpop.f32.mrb[0].mxu0
      %v1031 = vpop.f32.mrb[0].mxu0
      %v1032 = vadd.f32 %v373, %v1031
      %v1033 = vpop.f32.mrb[0].mxu0
      %1034 = vmatprep.mubr.bf16.mxu0 0
      %1035 = vmatmul.mubr.bf16.gmra.mrb[0].mxu0 %v544
      %v1036 = vpop.f32.mrb[0].mxu0
      %v1037 = vadd.f32 %v373, %v1036
      %v1038 = vpop.f32.mrb[0].mxu0
      %v1039 = vpop.f32.mrb[0].mxu0
      %v1040 = vadd.f32 %v373, %v1039
      %v1041 = vpop.f32.mrb[0].mxu0
      %1042 = vmatprep.mubr.bf16.mxu0 0
      %1043 = vmatmul.mubr.bf16.gmra.mrb[0].mxu0 %v547
      %v1044 = vpop.f32.mrb[0].mxu0
      %v1045 = vadd.f32 %v373, %v1044
      %v1046 = vpop.f32.mrb[0].mxu0
      %v1047 = vpop.f32.mrb[0].mxu0
      %v1048 = vadd.f32 %v373, %v1047
      %v1049 = vpop.f32.mrb[0].mxu0
      %1050 = vmatprep.mubr.bf16.mxu0 0
      %1051 = vmatmul.mubr.bf16.gmra.mrb[0].mxu0 %v550
      %v1052 = vpop.f32.mrb[0].mxu0
      %v1053 = vadd.f32 %v373, %v1052
      %v1054 = vpop.f32.mrb[0].mxu0
      %v1055 = vpop.f32.mrb[0].mxu0
      %v1056 = vadd.f32 %v373, %v1055
      %v1057 = vpop.f32.mrb[0].mxu0
      %1058 = vmatprep.mubr.bf16.mxu0 0
      %1059 = vmatmul.mubr.bf16.gmra.mrb[0].mxu0 %v553
      %v1060 = vpop.f32.mrb[0].mxu0
      %v1061 = vadd.f32 %v373, %v1060
      %v1062 = vpop.f32.mrb[0].mxu0
      %v1063 = vpop.f32.mrb[0].mxu0
      %v1064 = vadd.f32 %v373, %v1063
      %v1065 = vpop.f32.mrb[0].mxu0
      %1066 = vmatprep.mubr.bf16.mxu0 0
      %1067 = vmatmul.mubr.bf16.gmra.mrb[0].mxu0 %v556
      %v1068 = vpop.f32.mrb[0].mxu0
      %v1069 = vadd.f32 %v373, %v1068
      %v1070 = vpop.f32.mrb[0].mxu0
      %v1071 = vpop.f32.mrb[0].mxu0
      %v1072 = vadd.f32 %v373, %v1071
      %v1073 = vpop.f32.mrb[0].mxu0
      %1074 = vmatprep.mubr.bf16.mxu0 0
      %1075 = vmatmul.mubr.bf16.gmra.mrb[0].mxu0 %v559
      %v1076 = vpop.f32.mrb[0].mxu0
      %v1077 = vadd.f32 %v373, %v1076
      %v1078 = vpop.f32.mrb[0].mxu0
      %v1079 = vpop.f32.mrb[0].mxu0
      %v1080 = vadd.f32 %v373, %v1079
      %v1081 = vpop.f32.mrb[0].mxu0
      %1082 = vmatprep.mubr.bf16.mxu0 0
      %1083 = vmatmul.mubr.bf16.gmra.mrb[0].mxu0 %v562
      %v1084 = vpop.f32.mrb[0].mxu0
      %v1085 = vadd.f32 %v373, %v1084
      %v1086 = vpop.f32.mrb[0].mxu0
      %v1087 = vpop.f32.mrb[0].mxu0
      %v1088 = vadd.f32 %v373, %v1087
      %v1089 = vpop.f32.mrb[0].mxu0
      %1090 = vmatprep.mubr.bf16.mxu0 0
      %1091 = vmatmul.mubr.bf16.gmra.mrb[0].mxu0 %v565
      %v1092 = vpop.f32.mrb[0].mxu0
      %v1093 = vadd.f32 %v373, %v1092
      %v1094 = vpop.f32.mrb[0].mxu0
      %v1095 = vpop.f32.mrb[0].mxu0
      %v1096 = vadd.f32 %v373, %v1095
      %v1097 = vpop.f32.mrb[0].mxu0
      %1098 = vmatprep.mubr.bf16.mxu0 0
      %1099 = vmatmul.mubr.bf16.gmra.mrb[0].mxu0 %v568
      %v1100 = vpop.f32.mrb[0].mxu0
      %v1101 = vadd.f32 %v373, %v1100
      %v1102 = vpop.f32.mrb[0].mxu0
      %v1103 = vpop.f32.mrb[0].mxu0
      %v1104 = vadd.f32 %v373, %v1103
      %v1105 = vpop.f32.mrb[0].mxu0
      %1106 = vmatprep.mubr.bf16.mxu0 0
      %1107 = vmatmul.mubr.bf16.gmra.mrb[0].mxu0 %v571
      %v1108 = vpop.f32.mrb[0].mxu0
      %v1109 = vadd.f32 %v373, %v1108
      %v1110 = vpop.f32.mrb[0].mxu0
      %v1111 = vpop.f32.mrb[0].mxu0
      %v1112 = vadd.f32 %v373, %v1111
      %v1113 = vpop.f32.mrb[0].mxu0
      %1114 = vmatprep.mubr.bf16.mxu0 0
      %1115 = vmatmul.mubr.bf16.gmra.mrb[0].mxu0 %v574
      %v1116 = vpop.f32.mrb[0].mxu0
      %v1117 = vadd.f32 %v373, %v1116
      %v1118 = vpop.f32.mrb[0].mxu0
      %v1119 = vpop.f32.mrb[0].mxu0
      %v1120 = vadd.f32 %v373, %v1119
      %v1121 = vpop.f32.mrb[0].mxu0
      %1122 = vmatprep.mubr.bf16.mxu0 0
      %1123 = vmatmul.mubr.bf16.gmra.mrb[0].mxu0 %v577
      %v1124 = vpop.f32.mrb[0].mxu0
      %v1125 = vadd.f32 %v373, %v1124
      %v1126 = vpop.f32.mrb[0].mxu0
      %v1127 = vpop.f32.mrb[0].mxu0
      %v1128 = vadd.f32 %v373, %v1127
      %v1129 = vpop.f32.mrb[0].mxu0
      %1130 = vdwg.mxu0
      %v1131 = vmax.f32 %v621, 0.0
      %v1132 = vmax.f32 %v624, 0.0
      %v1133 = vmax.f32 %v629, 0.0
      %v1134 = vmax.f32 %v632, 0.0
      %v1135 = vmax.f32 %v637, 0.0
      %v1136 = vmax.f32 %v640, 0.0
      %v1137 = vmax.f32 %v645, 0.0
      %v1138 = vmax.f32 %v648, 0.0
      %v1139 = vmax.f32 %v653, 0.0
      %v1140 = vmax.f32 %v656, 0.0
      %v1141 = vmax.f32 %v661, 0.0
      %v1142 = vmax.f32 %v664, 0.0
      %v1143 = vmax.f32 %v669, 0.0
      %v1144 = vmax.f32 %v672, 0.0
      %v1145 = vmax.f32 %v677, 0.0
      %v1146 = vmax.f32 %v680, 0.0
      %v1147 = vmax.f32 %v685, 0.0
      %v1148 = vmax.f32 %v688, 0.0
      %v1149 = vmax.f32 %v693, 0.0
      %v1150 = vmax.f32 %v696, 0.0
      %v1151 = vmax.f32 %v701, 0.0
      %v1152 = vmax.f32 %v704, 0.0
      %v1153 = vmax.f32 %v709, 0.0
      %v1154 = vmax.f32 %v712, 0.0
      %v1155 = vmax.f32 %v717, 0.0
      %v1156 = vmax.f32 %v720, 0.0
      %v1157 = vmax.f32 %v725, 0.0
      %v1158 = vmax.f32 %v728, 0.0
      %v1159 = vmax.f32 %v733, 0.0
      %v1160 = vmax.f32 %v736, 0.0
      %v1161 = vmax.f32 %v741, 0.0
      %v1162 = vmax.f32 %v744, 0.0
      %v1163 = vmax.f32 %v749, 0.0
      %v1164 = vmax.f32 %v752, 0.0
      %v1165 = vmax.f32 %v757, 0.0
      %v1166 = vmax.f32 %v760, 0.0
      %v1167 = vmax.f32 %v765, 0.0
      %v1168 = vmax.f32 %v768, 0.0
      %v1169 = vmax.f32 %v773, 0.0
      %v1170 = vmax.f32 %v776, 0.0
      %v1171 = vmax.f32 %v781, 0.0
      %v1172 = vmax.f32 %v784, 0.0
      %v1173 = vmax.f32 %v789, 0.0
      %v1174 = vmax.f32 %v792, 0.0
      %v1175 = vmax.f32 %v797, 0.0
      %v1176 = vmax.f32 %v800, 0.0
      %v1177 = vmax.f32 %v805, 0.0
      %v1178 = vmax.f32 %v808, 0.0
      %v1179 = vmax.f32 %v813, 0.0
      %v1180 = vmax.f32 %v816, 0.0
      %v1181 = vmax.f32 %v821, 0.0
      %v1182 = vmax.f32 %v824, 0.0
      %v1183 = vmax.f32 %v829, 0.0
      %v1184 = vmax.f32 %v832, 0.0
      %v1185 = vmax.f32 %v837, 0.0
      %v1186 = vmax.f32 %v840, 0.0
      %v1187 = vmax.f32 %v845, 0.0
      %v1188 = vmax.f32 %v848, 0.0
      %v1189 = vmax.f32 %v853, 0.0
      %v1190 = vmax.f32 %v856, 0.0
      %v1191 = vmax.f32 %v861, 0.0
      %v1192 = vmax.f32 %v864, 0.0
      %v1193 = vmax.f32 %v869, 0.0
      %v1194 = vmax.f32 %v872, 0.0
      %v1195 = vmax.f32 %v877, 0.0
      %v1196 = vmax.f32 %v880, 0.0
      %v1197 = vmax.f32 %v885, 0.0
      %v1198 = vmax.f32 %v888, 0.0
      %v1199 = vmax.f32 %v893, 0.0
      %v1200 = vmax.f32 %v896, 0.0
      %v1201 = vmax.f32 %v901, 0.0
      %v1202 = vmax.f32 %v904, 0.0
      %v1203 = vmax.f32 %v909, 0.0
      %v1204 = vmax.f32 %v912, 0.0
      %v1205 = vmax.f32 %v917, 0.0
      %v1206 = vmax.f32 %v920, 0.0
      %v1207 = vmax.f32 %v925, 0.0
      %v1208 = vmax.f32 %v928, 0.0
      %v1209 = vmax.f32 %v933, 0.0
      %v1210 = vmax.f32 %v936, 0.0
      %v1211 = vmax.f32 %v941, 0.0
      %v1212 = vmax.f32 %v944, 0.0
      %v1213 = vmax.f32 %v949, 0.0
      %v1214 = vmax.f32 %v952, 0.0
      %v1215 = vmax.f32 %v957, 0.0
      %v1216 = vmax.f32 %v960, 0.0
      %v1217 = vmax.f32 %v965, 0.0
      %v1218 = vmax.f32 %v968, 0.0
      %v1219 = vmax.f32 %v973, 0.0
      %v1220 = vmax.f32 %v976, 0.0
      %v1221 = vmax.f32 %v981, 0.0
      %v1222 = vmax.f32 %v984, 0.0
      %v1223 = vmax.f32 %v989, 0.0
      %v1224 = vmax.f32 %v992, 0.0
      %v1225 = vmax.f32 %v997, 0.0
      %v1226 = vmax.f32 %v1000, 0.0
      %v1227 = vmax.f32 %v1005, 0.0
      %v1228 = vmax.f32 %v1008, 0.0
      %v1229 = vmax.f32 %v1013, 0.0
      %v1230 = vmax.f32 %v1016, 0.0
      %v1231 = vmax.f32 %v1021, 0.0
      %v1232 = vmax.f32 %v1024, 0.0
      %v1233 = vmax.f32 %v1029, 0.0
      %v1234 = vmax.f32 %v1032, 0.0
      %v1235 = vmax.f32 %v1037, 0.0
      %v1236 = vmax.f32 %v1040, 0.0
      %v1237 = vmax.f32 %v1045, 0.0
      %v1238 = vmax.f32 %v1048, 0.0
      %v1239 = vmax.f32 %v1053, 0.0
      %v1240 = vmax.f32 %v1056, 0.0
      %v1241 = vmax.f32 %v1061, 0.0
      %v1242 = vmax.f32 %v1064, 0.0
      %v1243 = vmax.f32 %v1069, 0.0
      %v1244 = vmax.f32 %v1072, 0.0
      %v1245 = vmax.f32 %v1077, 0.0
      %v1246 = vmax.f32 %v1080, 0.0
      %v1247 = vmax.f32 %v1085, 0.0
      %v1248 = vmax.f32 %v1088, 0.0
      %v1249 = vmax.f32 %v1093, 0.0
      %v1250 = vmax.f32 %v1096, 0.0
      %v1251 = vmax.f32 %v1101, 0.0
      %v1252 = vmax.f32 %v1104, 0.0
      %v1253 = vmax.f32 %v1109, 0.0
      %v1254 = vmax.f32 %v1112, 0.0
      %v1255 = vmax.f32 %v1117, 0.0
      %v1256 = vmax.f32 %v1120, 0.0
      %v1257 = vmax.f32 %v1125, 0.0
      %v1258 = vmax.f32 %v1128, 0.0
      %vm1259 = vcmask 130048
      %1260 = vst.msk [vmem:[%s170] sm:$0xff] %vm1259, %v1131
      %1261 = vst.msk [vmem:[%s170 + $0x8] sm:$0xff] %vm1259, %v1132
      %1262 = vst.msk [vmem:[%s170 + $0x10] sm:$0xff] %vm1259, %v1133
      %1263 = vst.msk [vmem:[%s170 + $0x18] sm:$0xff] %vm1259, %v1134
      %1264 = vst.msk [vmem:[%s170 + $0x20] sm:$0xff] %vm1259, %v1135
      %1265 = vst.msk [vmem:[%s170 + $0x28] sm:$0xff] %vm1259, %v1136
      %1266 = vst.msk [vmem:[%s170 + $0x30] sm:$0xff] %vm1259, %v1137
      %1267 = vst.msk [vmem:[%s170 + $0x38] sm:$0xff] %vm1259, %v1138
      %1268 = vst.msk [vmem:[%s170 + $0x40] sm:$0xff] %vm1259, %v1139
      %1269 = vst.msk [vmem:[%s170 + $0x48] sm:$0xff] %vm1259, %v1140
      %1270 = vst.msk [vmem:[%s170 + $0x50] sm:$0xff] %vm1259, %v1141
      %1271 = vst.msk [vmem:[%s170 + $0x58] sm:$0xff] %vm1259, %v1142
      %1272 = vst.msk [vmem:[%s170 + $0x60] sm:$0xff] %vm1259, %v1143
      %1273 = vst.msk [vmem:[%s170 + $0x68] sm:$0xff] %vm1259, %v1144
      %1274 = vst.msk [vmem:[%s170 + $0x70] sm:$0xff] %vm1259, %v1145
      %1275 = vst.msk [vmem:[%s170 + $0x78] sm:$0xff] %vm1259, %v1146
      %1276 = vst.msk [vmem:[%s170 + $0x80] sm:$0xff] %vm1259, %v1147
      %1277 = vst.msk [vmem:[%s170 + $0x88] sm:$0xff] %vm1259, %v1148
      %1278 = vst.msk [vmem:[%s170 + $0x90] sm:$0xff] %vm1259, %v1149
      %1279 = vst.msk [vmem:[%s170 + $0x98] sm:$0xff] %vm1259, %v1150
      %1280 = vst.msk [vmem:[%s170 + $0xa0] sm:$0xff] %vm1259, %v1151
      %1281 = vst.msk [vmem:[%s170 + $0xa8] sm:$0xff] %vm1259, %v1152
      %1282 = vst.msk [vmem:[%s170 + $0xb0] sm:$0xff] %vm1259, %v1153
      %1283 = vst.msk [vmem:[%s170 + $0xb8] sm:$0xff] %vm1259, %v1154
      %1284 = vst.msk [vmem:[%s170 + $0xc0] sm:$0xff] %vm1259, %v1155
      %1285 = vst.msk [vmem:[%s170 + $0xc8] sm:$0xff] %vm1259, %v1156
      %1286 = vst.msk [vmem:[%s170 + $0xd0] sm:$0xff] %vm1259, %v1157
      %1287 = vst.msk [vmem:[%s170 + $0xd8] sm:$0xff] %vm1259, %v1158
      %1288 = vst.msk [vmem:[%s170 + $0xe0] sm:$0xff] %vm1259, %v1159
      %1289 = vst.msk [vmem:[%s170 + $0xe8] sm:$0xff] %vm1259, %v1160
      %1290 = vst.msk [vmem:[%s170 + $0xf0] sm:$0xff] %vm1259, %v1161
      %1291 = vst.msk [vmem:[%s170 + $0xf8] sm:$0xff] %vm1259, %v1162
      %1292 = vst.msk [vmem:[%s170 + $0x100] sm:$0xff] %vm1259, %v1163
      %1293 = vst.msk [vmem:[%s170 + $0x108] sm:$0xff] %vm1259, %v1164
      %1294 = vst.msk [vmem:[%s170 + $0x110] sm:$0xff] %vm1259, %v1165
      %1295 = vst.msk [vmem:[%s170 + $0x118] sm:$0xff] %vm1259, %v1166
      %1296 = vst.msk [vmem:[%s170 + $0x120] sm:$0xff] %vm1259, %v1167
      %1297 = vst.msk [vmem:[%s170 + $0x128] sm:$0xff] %vm1259, %v1168
      %1298 = vst.msk [vmem:[%s170 + $0x130] sm:$0xff] %vm1259, %v1169
      %1299 = vst.msk [vmem:[%s170 + $0x138] sm:$0xff] %vm1259, %v1170
      %1300 = vst.msk [vmem:[%s170 + $0x140] sm:$0xff] %vm1259, %v1171
      %1301 = vst.msk [vmem:[%s170 + $0x148] sm:$0xff] %vm1259, %v1172
      %1302 = vst.msk [vmem:[%s170 + $0x150] sm:$0xff] %vm1259, %v1173
      %1303 = vst.msk [vmem:[%s170 + $0x158] sm:$0xff] %vm1259, %v1174
      %1304 = vst.msk [vmem:[%s170 + $0x160] sm:$0xff] %vm1259, %v1175
      %1305 = vst.msk [vmem:[%s170 + $0x168] sm:$0xff] %vm1259, %v1176
      %1306 = vst.msk [vmem:[%s170 + $0x170] sm:$0xff] %vm1259, %v1177
      %1307 = vst.msk [vmem:[%s170 + $0x178] sm:$0xff] %vm1259, %v1178
      %1308 = vst.msk [vmem:[%s170 + $0x180] sm:$0xff] %vm1259, %v1179
      %1309 = vst.msk [vmem:[%s170 + $0x188] sm:$0xff] %vm1259, %v1180
      %1310 = vst.msk [vmem:[%s170 + $0x190] sm:$0xff] %vm1259, %v1181
      %1311 = vst.msk [vmem:[%s170 + $0x198] sm:$0xff] %vm1259, %v1182
      %1312 = vst.msk [vmem:[%s170 + $0x1a0] sm:$0xff] %vm1259, %v1183
      %1313 = vst.msk [vmem:[%s170 + $0x1a8] sm:$0xff] %vm1259, %v1184
      %1314 = vst.msk [vmem:[%s170 + $0x1b0] sm:$0xff] %vm1259, %v1185
      %1315 = vst.msk [vmem:[%s170 + $0x1b8] sm:$0xff] %vm1259, %v1186
      %1316 = vst.msk [vmem:[%s170 + $0x1c0] sm:$0xff] %vm1259, %v1187
      %1317 = vst.msk [vmem:[%s170 + $0x1c8] sm:$0xff] %vm1259, %v1188
      %1318 = vst.msk [vmem:[%s170 + $0x1d0] sm:$0xff] %vm1259, %v1189
      %1319 = vst.msk [vmem:[%s170 + $0x1d8] sm:$0xff] %vm1259, %v1190
      %1320 = vst.msk [vmem:[%s170 + $0x1e0] sm:$0xff] %vm1259, %v1191
      %1321 = vst.msk [vmem:[%s170 + $0x1e8] sm:$0xff] %vm1259, %v1192
      %1322 = vst.msk [vmem:[%s170 + $0x1f0] sm:$0xff] %vm1259, %v1193
      %1323 = vst.msk [vmem:[%s170 + $0x1f8] sm:$0xff] %vm1259, %v1194
      %1324 = vst.msk [vmem:[%s170 + $0x200] sm:$0xff] %vm1259, %v1195
      %1325 = vst.msk [vmem:[%s170 + $0x208] sm:$0xff] %vm1259, %v1196
      %1326 = vst.msk [vmem:[%s170 + $0x210] sm:$0xff] %vm1259, %v1197
      %1327 = vst.msk [vmem:[%s170 + $0x218] sm:$0xff] %vm1259, %v1198
      %1328 = vst.msk [vmem:[%s170 + $0x220] sm:$0xff] %vm1259, %v1199
      %1329 = vst.msk [vmem:[%s170 + $0x228] sm:$0xff] %vm1259, %v1200
      %1330 = vst.msk [vmem:[%s170 + $0x230] sm:$0xff] %vm1259, %v1201
      %1331 = vst.msk [vmem:[%s170 + $0x238] sm:$0xff] %vm1259, %v1202
      %1332 = vst.msk [vmem:[%s170 + $0x240] sm:$0xff] %vm1259, %v1203
      %1333 = vst.msk [vmem:[%s170 + $0x248] sm:$0xff] %vm1259, %v1204
      %1334 = vst.msk [vmem:[%s170 + $0x250] sm:$0xff] %vm1259, %v1205
      %1335 = vst.msk [vmem:[%s170 + $0x258] sm:$0xff] %vm1259, %v1206
      %1336 = vst.msk [vmem:[%s170 + $0x260] sm:$0xff] %vm1259, %v1207
      %1337 = vst.msk [vmem:[%s170 + $0x268] sm:$0xff] %vm1259, %v1208
      %1338 = vst.msk [vmem:[%s170 + $0x270] sm:$0xff] %vm1259, %v1209
      %1339 = vst.msk [vmem:[%s170 + $0x278] sm:$0xff] %vm1259, %v1210
      %1340 = vst.msk [vmem:[%s170 + $0x280] sm:$0xff] %vm1259, %v1211
      %1341 = vst.msk [vmem:[%s170 + $0x288] sm:$0xff] %vm1259, %v1212
      %1342 = vst.msk [vmem:[%s170 + $0x290] sm:$0xff] %vm1259, %v1213
      %1343 = vst.msk [vmem:[%s170 + $0x298] sm:$0xff] %vm1259, %v1214
      %1344 = vst.msk [vmem:[%s170 + $0x2a0] sm:$0xff] %vm1259, %v1215
      %1345 = vst.msk [vmem:[%s170 + $0x2a8] sm:$0xff] %vm1259, %v1216
      %1346 = vst.msk [vmem:[%s170 + $0x2b0] sm:$0xff] %vm1259, %v1217
      %1347 = vst.msk [vmem:[%s170 + $0x2b8] sm:$0xff] %vm1259, %v1218
      %1348 = vst.msk [vmem:[%s170 + $0x2c0] sm:$0xff] %vm1259, %v1219
      %1349 = vst.msk [vmem:[%s170 + $0x2c8] sm:$0xff] %vm1259, %v1220
      %1350 = vst.msk [vmem:[%s170 + $0x2d0] sm:$0xff] %vm1259, %v1221
      %1351 = vst.msk [vmem:[%s170 + $0x2d8] sm:$0xff] %vm1259, %v1222
      %1352 = vst.msk [vmem:[%s170 + $0x2e0] sm:$0xff] %vm1259, %v1223
      %1353 = vst.msk [vmem:[%s170 + $0x2e8] sm:$0xff] %vm1259, %v1224
      %1354 = vst.msk [vmem:[%s170 + $0x2f0] sm:$0xff] %vm1259, %v1225
      %1355 = vst.msk [vmem:[%s170 + $0x2f8] sm:$0xff] %vm1259, %v1226
      %1356 = vst.msk [vmem:[%s170 + $0x300] sm:$0xff] %vm1259, %v1227
      %1357 = vst.msk [vmem:[%s170 + $0x308] sm:$0xff] %vm1259, %v1228
      %1358 = vst.msk [vmem:[%s170 + $0x310] sm:$0xff] %vm1259, %v1229
      %1359 = vst.msk [vmem:[%s170 + $0x318] sm:$0xff] %vm1259, %v1230
      %1360 = vst.msk [vmem:[%s170 + $0x320] sm:$0xff] %vm1259, %v1231
      %1361 = vst.msk [vmem:[%s170 + $0x328] sm:$0xff] %vm1259, %v1232
      %1362 = vst.msk [vmem:[%s170 + $0x330] sm:$0xff] %vm1259, %v1233
      %1363 = vst.msk [vmem:[%s170 + $0x338] sm:$0xff] %vm1259, %v1234
      %1364 = vst.msk [vmem:[%s170 + $0x340] sm:$0xff] %vm1259, %v1235
      %1365 = vst.msk [vmem:[%s170 + $0x348] sm:$0xff] %vm1259, %v1236
      %1366 = vst.msk [vmem:[%s170 + $0x350] sm:$0xff] %vm1259, %v1237
      %1367 = vst.msk [vmem:[%s170 + $0x358] sm:$0xff] %vm1259, %v1238
      %1368 = vst.msk [vmem:[%s170 + $0x360] sm:$0xff] %vm1259, %v1239
      %1369 = vst.msk [vmem:[%s170 + $0x368] sm:$0xff] %vm1259, %v1240
      %1370 = vst.msk [vmem:[%s170 + $0x370] sm:$0xff] %vm1259, %v1241
      %1371 = vst.msk [vmem:[%s170 + $0x378] sm:$0xff] %vm1259, %v1242
      %1372 = vst.msk [vmem:[%s170 + $0x380] sm:$0xff] %vm1259, %v1243
      %1373 = vst.msk [vmem:[%s170 + $0x388] sm:$0xff] %vm1259, %v1244
      %1374 = vst.msk [vmem:[%s170 + $0x390] sm:$0xff] %vm1259, %v1245
      %1375 = vst.msk [vmem:[%s170 + $0x398] sm:$0xff] %vm1259, %v1246
      %1376 = vst.msk [vmem:[%s170 + $0x3a0] sm:$0xff] %vm1259, %v1247
      %1377 = vst.msk [vmem:[%s170 + $0x3a8] sm:$0xff] %vm1259, %v1248
      %1378 = vst.msk [vmem:[%s170 + $0x3b0] sm:$0xff] %vm1259, %v1249
      %1379 = vst.msk [vmem:[%s170 + $0x3b8] sm:$0xff] %vm1259, %v1250
      %1380 = vst.msk [vmem:[%s170 + $0x3c0] sm:$0xff] %vm1259, %v1251
      %1381 = vst.msk [vmem:[%s170 + $0x3c8] sm:$0xff] %vm1259, %v1252
      %1382 = vst.msk [vmem:[%s170 + $0x3d0] sm:$0xff] %vm1259, %v1253
      %1383 = vst.msk [vmem:[%s170 + $0x3d8] sm:$0xff] %vm1259, %v1254
      %1384 = vst.msk [vmem:[%s170 + $0x3e0] sm:$0xff] %vm1259, %v1255
      %1385 = vst.msk [vmem:[%s170 + $0x3e8] sm:$0xff] %vm1259, %v1256
      %1386 = vst.msk [vmem:[%s170 + $0x3f0] sm:$0xff] %vm1259, %v1257
      %1387 = vst.msk [vmem:[%s170 + $0x3f8] sm:$0xff] %vm1259, %v1258
      %p1388 = scmp.lt.s32.totalorder %s14, 1
      %s1389 = scalar_select %p1388, %s14, 1
      %s1390 = smul.addr %s1389, 128
      %s1391 = smul.addr %s1390, 8
      %s1392 = scalar_lea.vmem %s3, %s1391
      // Predicated region
      $region33: #{tpu_custom_call.1} parent=31 // pred_check
        %p1393 = pneg %p100
      $region34: #{tpu_custom_call.1} parent=31 // pred_check_branch
        %1395 = sbr.rel (%p1393) target = $region36
      $region35: #{tpu_custom_call.1} parent=31 // pred_region
        _
      $region36: #{tpu_custom_call.1} parent=31 // pred_fallthru
        _
    $region32: #{tpu_custom_call.1} parent=5 // pred_fallthru
      _
    %p1396 = scmp.le.s32.totalorder 2, %s9
    // Predicated region
    $region37: #{tpu_custom_call.1} parent=5 // pred_check
      %p1397 = pneg %p1396
    $region38: #{tpu_custom_call.1} parent=5 // pred_check_branch
      %1399 = sbr.rel (%p1397) target = $region40
    $region39: #{tpu_custom_call.1} parent=5 // pred_region
      %s1400 = ssub.s32 %s9, 2
      // Predicated region
      $region41: #{tpu_custom_call.1} parent=39 // pred_check
        %p1401 = pneg %p106
      $region42: #{tpu_custom_call.1} parent=39 // pred_check_branch
        %1403 = sbr.rel (%p1401) target = $region44
      $region43: #{tpu_custom_call.1} parent=39 // pred_region
        %p1404 = scmp.lt.s32.totalorder %s15, 1
        %s1405 = scalar_select %p1404, %s15, 1
        %s1406 = smul.addr %s1405, 128
        %s1407 = smul.addr %s1406, 8
        %s1408 = scalar_lea.vmem %s3, %s1407
      $region44: #{tpu_custom_call.1} parent=39 // pred_fallthru
        _
    $region40: #{tpu_custom_call.1} parent=5 // pred_fallthru
      _
  $region6: #{tpu_custom_call.1} parent=0 // loop_footer
    %s13 = sadd.s32 1, %s9
  $region7: #{tpu_custom_call.1} parent=0 // loop_footer_branch
    %8 = sbr.rel target = $region3
  $region8: #{tpu_custom_call.1} parent=0 // loop_exit
    _

</llo_original>
